<compile_context>
chip_gen: v7x
topology: tpu7x:2x2x1
jax: 0.10.0
libtpu: 0.0.40
codegen_flags: <defaults>
</compile_context>

<pallas_src>
import functools

import jax
import jax.numpy as jnp
from jax.experimental import pallas as pl
from jax.experimental.pallas import tpu as pltpu


def mlp_logsoftmax_kernel(x_ref, w1_ref, b1_ref, w2_ref, b2_ref, out_ref):
    """Linear -> Linear -> LogSoftmax(axis=1) on one batch tile.

    x_ref  : (TB, I)   float32
    w1_ref : (I, H)    float32   (resident across batch tiles)
    b1_ref : (1, H)    float32
    w2_ref : (H, O)    float32   (resident across batch tiles)
    b2_ref : (1, O)    float32
    out_ref: (TB, O)   float32
    """
    x = x_ref[...]

    # layer_1: x @ W1 + b1   (MXU, f32 accumulate)
    h = jnp.dot(x, w1_ref[...], preferred_element_type=jnp.float32) + b1_ref[...]

    # layer_2: h @ W2 + b2   (MXU, f32 accumulate)
    logits = jnp.dot(h, w2_ref[...], preferred_element_type=jnp.float32) + b2_ref[...]

    # Numerically-stable LogSoftmax along the feature axis (per row).
    m = jnp.max(logits, axis=1, keepdims=True)
    shifted = logits - m
    lse = jnp.log(jnp.sum(jnp.exp(shifted), axis=1, keepdims=True))
    out_ref[...] = (shifted - lse).astype(out_ref.dtype)


def _round_up(n, m):
    return (n + m - 1) // m * m


def _choose_batch_tile(batch, batch_tile):
    """Pick a batch tile.

    Small batches: one full-array batch block (always layout-legal, no padding).
    Large batches: 128-row-aligned tiles, capped so the grid has >= 2 steps
    (lets v7x's two TensorCores each take tiles via the 'parallel' axis).
    """
    if batch <= batch_tile:
        return batch
    tb = min(batch_tile, _round_up(pl.cdiv(batch, 2), 128))
    return max(tb, 128)


@functools.partial(jax.jit, static_argnames=("batch_tile",))
def my_network_forward(x, w1, b1, w2, b2, *, batch_tile=512):
    """x:(B,I)  w1:(I,H)  b1:(H,) or (1,H)  w2:(H,O)  b2:(O,) or (1,O) -> (B,O) log-probs.

    Weights are stored (in_features, out_features): the kernel computes x @ W + b,
    the transpose of PyTorch's nn.Linear (out,in) storage — identical math.
    """
    B, I = x.shape
    H = w1.shape[1]
    O = w2.shape[1]

    # Biases come in as (H,)/(O,) (PyTorch layout) or already (1,H)/(1,O).
    b1 = b1.reshape(1, H)
    b2 = b2.reshape(1, O)

    TB = _choose_batch_tile(B, batch_tile)
    grid = (pl.cdiv(B, TB),)

    return pl.pallas_call(
        mlp_logsoftmax_kernel,
        out_shape=jax.ShapeDtypeStruct((B, O), jnp.float32),
        grid=grid,
        in_specs=[
            pl.BlockSpec((TB, I), lambda i: (i, 0)),   # batch-tiled activations
            pl.BlockSpec((I, H), lambda i: (0, 0)),    # weights stay VMEM-resident
            pl.BlockSpec((1, H), lambda i: (0, 0)),
            pl.BlockSpec((H, O), lambda i: (0, 0)),
            pl.BlockSpec((1, O), lambda i: (0, 0)),
        ],
        out_specs=pl.BlockSpec((TB, O), lambda i: (i, 0)),
        compiler_params=pltpu.CompilerParams(
            dimension_semantics=("parallel",),  # shard batch tiles across TCs (v7x)
        ),
    )(x, w1, b1, w2, b2)


if __name__ == "__main__":
    # Small shapes implied by the module: X is (batch, size_input).
    batch, size_input, size_hidden, size_output = 8, 32, 64, 16

    key = jax.random.PRNGKey(0)
    kx, kw1, kb1, kw2, kb2 = jax.random.split(key, 5)

    x = jax.random.normal(kx, (batch, size_input), dtype=jnp.float32)

    # Deterministic parameter init (uniform like PyTorch's default Linear init),
    # stored as (in_features, out_features); biases in PyTorch's flat layout.
    bound1 = 1.0 / (size_input ** 0.5)
    w1 = jax.random.uniform(kw1, (size_input, size_hidden), jnp.float32, -bound1, bound1)
    b1 = jax.random.uniform(kb1, (size_hidden,), jnp.float32, -bound1, bound1)

    bound2 = 1.0 / (size_hidden ** 0.5)
    w2 = jax.random.uniform(kw2, (size_hidden, size_output), jnp.float32, -bound2, bound2)
    b2 = jax.random.uniform(kb2, (size_output,), jnp.float32, -bound2, bound2)

    out = my_network_forward(x, w1, b1, w2, b2)
    jax.block_until_ready(out)

    # Reference check in plain JAX (same math as the PyTorch forward).
    ref = jax.nn.log_softmax((x @ w1 + b1[None, :]) @ w2 + b2[None, :], axis=1)
    assert out.shape == ref.shape, "shape mismatch vs reference"
    assert jnp.allclose(out, ref, atol=1e-5), "mismatch vs reference"

    print("KERNEL_OK")
</pallas_src>

<mosaic_0001>
module attributes {stable_mosaic.version = 11 : i64} {
  func.func @mlp_logsoftmax_kernel(%arg0: i32, %arg1: memref<8x32xf32, #tpu.memory_space<vmem>>, %arg2: memref<32x64xf32, #tpu.memory_space<vmem>>, %arg3: memref<1x64xf32, #tpu.memory_space<vmem>>, %arg4: memref<64x16xf32, #tpu.memory_space<vmem>>, %arg5: memref<1x16xf32, #tpu.memory_space<vmem>>, %arg6: memref<8x16xf32, #tpu.memory_space<vmem>>) attributes {dimension_semantics = [#tpu.dimension_semantics<parallel>], iteration_bounds = array<i64: 1>, scalar_prefetch = 0 : i64, scratch_operands = 0 : i64, tpu.core_type = #tpu.core_type<tc>, window_params = [{transform_indices = @transform_0, window_bounds = array<i64: 8, 32>}, {pipeline_mode = #tpu.pipeline_mode<synchronous>, transform_indices = @transform_1, window_bounds = array<i64: 32, 64>}, {pipeline_mode = #tpu.pipeline_mode<synchronous>, transform_indices = @transform_2, window_bounds = array<i64: 1, 64>}, {pipeline_mode = #tpu.pipeline_mode<synchronous>, transform_indices = @transform_3, window_bounds = array<i64: 64, 16>}, {pipeline_mode = #tpu.pipeline_mode<synchronous>, transform_indices = @transform_4, window_bounds = array<i64: 1, 16>}, {transform_indices = @transform_5, window_bounds = array<i64: 8, 16>}]} {
    %c0 = arith.constant 0 : index
    %c0_0 = arith.constant 0 : index
    %0 = vector.load %arg1[%c0, %c0_0] : memref<8x32xf32, #tpu.memory_space<vmem>>, vector<8x32xf32>
    %c0_1 = arith.constant 0 : index
    %c0_2 = arith.constant 0 : index
    %1 = vector.load %arg2[%c0_1, %c0_2] : memref<32x64xf32, #tpu.memory_space<vmem>>, vector<32x64xf32>
    %cst = arith.constant dense<0.000000e+00> : vector<8x64xf32>
    %2 = tpu.matmul %0, %1, %cst {dimension_numbers = #tpu.dot_dimension_numbers<[1], [0], [0], [1], [0, 0, 1, 1], [], []>} : vector<8x32xf32>, vector<32x64xf32>, vector<8x64xf32> -> vector<8x64xf32>
    %c0_3 = arith.constant 0 : index
    %c0_4 = arith.constant 0 : index
    %3 = vector.load %arg3[%c0_3, %c0_4] : memref<1x64xf32, #tpu.memory_space<vmem>>, vector<1x64xf32>
    %4 = vector.broadcast %3 : vector<1x64xf32> to vector<8x64xf32>
    %5 = arith.addf %2, %4 : vector<8x64xf32>
    %c0_5 = arith.constant 0 : index
    %c0_6 = arith.constant 0 : index
    %6 = vector.load %arg4[%c0_5, %c0_6] : memref<64x16xf32, #tpu.memory_space<vmem>>, vector<64x16xf32>
    %cst_7 = arith.constant dense<0.000000e+00> : vector<8x16xf32>
    %7 = tpu.matmul %5, %6, %cst_7 {dimension_numbers = #tpu.dot_dimension_numbers<[1], [0], [0], [1], [0, 0, 1, 1], [], []>} : vector<8x64xf32>, vector<64x16xf32>, vector<8x16xf32> -> vector<8x16xf32>
    %c0_8 = arith.constant 0 : index
    %c0_9 = arith.constant 0 : index
    %8 = vector.load %arg5[%c0_8, %c0_9] : memref<1x16xf32, #tpu.memory_space<vmem>>, vector<1x16xf32>
    %9 = vector.broadcast %8 : vector<1x16xf32> to vector<8x16xf32>
    %10 = arith.addf %7, %9 : vector<8x16xf32>
    %cst_10 = arith.constant dense<0xFF800000> : vector<8xf32>
    %11 = vector.multi_reduction <maximumf>, %10, %cst_10 [1] : vector<8x16xf32> to vector<8xf32>
    %12 = vector.shape_cast %11 : vector<8xf32> to vector<8x1xf32>
    %13 = vector.broadcast %12 : vector<8x1xf32> to vector<8x16xf32>
    %14 = arith.subf %10, %13 : vector<8x16xf32>
    %15 = math.exp %14 : vector<8x16xf32>
    %cst_11 = arith.constant dense<0.000000e+00> : vector<8xf32>
    %16 = vector.multi_reduction <add>, %15, %cst_11 [1] : vector<8x16xf32> to vector<8xf32>
    %17 = vector.shape_cast %16 : vector<8xf32> to vector<8x1xf32>
    %18 = math.log %17 : vector<8x1xf32>
    %19 = vector.broadcast %18 : vector<8x1xf32> to vector<8x16xf32>
    %20 = arith.subf %14, %19 : vector<8x16xf32>
    %c0_12 = arith.constant 0 : index
    %c0_13 = arith.constant 0 : index
    %21 = vector.load %arg6[%c0_12, %c0_13] : memref<8x16xf32, #tpu.memory_space<vmem>>, vector<8x16xf32>
    tpu.vector_store %arg6[%c0_12, %c0_13], %20 {strides = array<i32>} : memref<8x16xf32, #tpu.memory_space<vmem>>, vector<8x16xf32>,
    return
  }
  func.func @transform_0(%arg0: i32) -> (i32, i32) {
    %c0_i32 = arith.constant 0 : i32
    %c0_i32_0 = arith.constant 0 : i32
    return %arg0, %c0_i32 : i32, i32
  }
  func.func @transform_1(%arg0: i32) -> (i32, i32) {
    %c0_i32 = arith.constant 0 : i32
    %c0_i32_0 = arith.constant 0 : i32
    %c0_i32_1 = arith.constant 0 : i32
    return %c0_i32, %c0_i32_0 : i32, i32
  }
  func.func @transform_2(%arg0: i32) -> (i32, i32) {
    %c0_i32 = arith.constant 0 : i32
    %c0_i32_0 = arith.constant 0 : i32
    %c0_i32_1 = arith.constant 0 : i32
    return %c0_i32, %c0_i32_0 : i32, i32
  }
  func.func @transform_3(%arg0: i32) -> (i32, i32) {
    %c0_i32 = arith.constant 0 : i32
    %c0_i32_0 = arith.constant 0 : i32
    %c0_i32_1 = arith.constant 0 : i32
    return %c0_i32, %c0_i32_0 : i32, i32
  }
  func.func @transform_4(%arg0: i32) -> (i32, i32) {
    %c0_i32 = arith.constant 0 : i32
    %c0_i32_0 = arith.constant 0 : i32
    %c0_i32_1 = arith.constant 0 : i32
    return %c0_i32, %c0_i32_0 : i32, i32
  }
  func.func @transform_5(%arg0: i32) -> (i32, i32) {
    %c0_i32 = arith.constant 0 : i32
    %c0_i32_0 = arith.constant 0 : i32
    return %arg0, %c0_i32 : i32, i32
  }
}

</mosaic_0001>

<llo_original>
// kernel: my_network_forward.1
$region0: #{my_network_forward.1}
  #allocation0 [shape = 'u32[]', space=smem, size = 0x4, offset = 0x4, fixed_abs, tag = 'smem constant byte address 0x4 - core index']
  #allocation1 [shape = 'u32[144,128]{1,0:T(1,128)}', space=vmem, size = 0x12000, scoped, tag = 'internal scratch']
  %s0 = inlined_call_operand.vmem [shape: f32[8,32], index: 0, kind: input, shape index: {}]
  %s1 = inlined_call_operand.vmem [shape: f32[32,64], index: 1, kind: input, shape index: {}]
  %s2 = inlined_call_operand.vmem [shape: f32[1,64], index: 2, kind: input, shape index: {}]
  %s3 = inlined_call_operand.vmem [shape: f32[64,16], index: 3, kind: input, shape index: {}]
  %s4 = inlined_call_operand.vmem [shape: f32[1,16], index: 4, kind: input, shape index: {}]
  %s5 = inlined_call_operand.hbm [shape: f32[8,16], index: 5, kind: output, shape index: {}]
  %s6 = sld [smem:[#allocation0]]
  $region30: #{my_network_forward.1} parent=0
    _
  %s8 = ssub.s32 1, %s6
  %s9 = scalar_select 0, %s8, %s6
  $region1: #{my_network_forward.1} parent=0
    #allocation2 [shape = 'u8[4096]{0}', space=vmem, size = 0x1000, scoped, tag = 'output window, operand 0, single buffered']
    #allocation3 [shape = 's32[1]{0}', space=sflag, size = 0x4, scoped, tag = 'scoped memory for my_network_forward.1']
    %10 = vsyncpa [#allocation3], 0
    // Predicated region
    $region2: #{my_network_forward.1} parent=1 // pred_check
      _
    $region3: #{my_network_forward.1} parent=1 // pred_check_branch
      %12 = sbr.rel (0) target = $region5
    $region4: #{my_network_forward.1} parent=1 // pred_region
      _
    $region5: #{my_network_forward.1} parent=1 // pred_fallthru
      _
    // Predicated region
    $region6: #{my_network_forward.1} parent=1 // pred_check
      _
    $region7: #{my_network_forward.1} parent=1 // pred_check_branch
      %14 = sbr.rel (0) target = $region9
    $region8: #{my_network_forward.1} parent=1 // pred_region
      _
    $region9: #{my_network_forward.1} parent=1 // pred_fallthru
      _
    // Predicated region
    $region10: #{my_network_forward.1} parent=1 // pred_check
      _
    $region11: #{my_network_forward.1} parent=1 // pred_check_branch
      %16 = sbr.rel (0) target = $region13
    $region12: #{my_network_forward.1} parent=1 // pred_region
      _
    $region13: #{my_network_forward.1} parent=1 // pred_fallthru
      _
    // Predicated region
    $region14: #{my_network_forward.1} parent=1 // pred_check
      _
    $region15: #{my_network_forward.1} parent=1 // pred_check_branch
      %18 = sbr.rel (0) target = $region17
    $region16: #{my_network_forward.1} parent=1 // pred_region
      _
    $region17: #{my_network_forward.1} parent=1 // pred_fallthru
      _
    // Predicated region
    $region18: #{my_network_forward.1} parent=1 // pred_check
      _
    $region19: #{my_network_forward.1} parent=1 // pred_check_branch
      %20 = sbr.rel (0) target = $region21
    $region20: #{my_network_forward.1} parent=1 // pred_region
      _
    $region21: #{my_network_forward.1} parent=1 // pred_fallthru
      _
    %v21 = vld [vmem:[%s0] sm:$0xff]
    %v22 = vld [vmem:[%s1] sm:$0xff]
    %v23 = vld [vmem:[%s1 + $0x8] sm:$0xff]
    %v24 = vld [vmem:[%s1 + $0x10] sm:$0xff]
    %v25 = vld [vmem:[%s1 + $0x18] sm:$0xff]
    %v26 = vld [vmem:[%s2] sm:$0x1]
    %v28 = vlaneseq
    %v29 = vshrl.u32 %v28, 7
    %v30 = vsub.s32 0, %v29
    %v31 = vrot.slane %v26, %v30
    %vm33 = vcmask 261120
    %v35 = vsel %vm33, %v21, 0
    %37 = vmatprep.subr.mxu0 0.0
    %38 = vmatpush1.msra.mxu0 %v22
    %39 = vmatprep.subr.mxu0 0.0
    %40 = vmatpush1.msra.mxu0 %v23
    %41 = vmatprep.subr.mxu0 0.0
    %42 = vmatpush1.msra.mxu0 %v24
    %43 = vmatprep.subr.mxu0 0.0
    %44 = vmatpush1.msra.mxu0 %v25
    %45 = vmatprep.subr.mxu0 0.0
    %46 = vmatpush1.msra.mxu0 0.0
    %47 = vmatprep.subr.mxu0 0.0
    %48 = vmatpush1.msra.mxu0 0.0
    %49 = vmatprep.subr.mxu0 0.0
    %50 = vmatpush1.msra.mxu0 0.0
    %51 = vmatprep.subr.mxu0 0.0
    %52 = vmatpush1.msra.mxu0 0.0
    %53 = vmatprep.subr.mxu0 0.0
    %54 = vmatpush1.msra.mxu0 0.0
    %55 = vmatprep.subr.mxu0 0.0
    %56 = vmatpush1.msra.mxu0 0.0
    %57 = vmatprep.subr.mxu0 0.0
    %58 = vmatpush1.msra.mxu0 0.0
    %59 = vmatprep.subr.mxu0 0.0
    %60 = vmatpush1.msra.mxu0 0.0
    %61 = vmatprep.subr.mxu0 0.0
    %62 = vmatpush1.msra.mxu0 0.0
    %63 = vmatprep.subr.mxu0 0.0
    %64 = vmatpush1.msra.mxu0 0.0
    %65 = vmatprep.subr.mxu0 0.0
    %66 = vmatpush1.msra.mxu0 0.0
    %67 = vmatprep.subr.mxu0 0.0
    %68 = vmatpush1.msra.mxu0 0.0
    %69 = vmatprep.subr.mxu0 0.0
    %70 = vmatpush1.msra.mxu0 0.0
    %71 = vmatprep.subr.mxu0 0.0
    %72 = vmatpush1.msra.mxu0 0.0
    %73 = vmatprep.subr.mxu0 0.0
    %74 = vmatpush1.msra.mxu0 0.0
    %75 = vmatprep.subr.mxu0 0.0
    %76 = vmatpush1.msra.mxu0 0.0
    %77 = vmatprep.subr.mxu0 0.0
    %78 = vmatpush1.msra.mxu0 0.0
    %79 = vmatprep.subr.mxu0 0.0
    %80 = vmatpush1.msra.mxu0 0.0
    %81 = vmatprep.subr.mxu0 0.0
    %82 = vmatpush1.msra.mxu0 0.0
    %83 = vmatprep.subr.mxu0 0.0
    %84 = vmatpush1.msra.mxu0 0.0
    %85 = vmatprep.subr.mxu0 0.0
    %86 = vmatpush1.msra.mxu0 0.0
    %87 = vmatprep.subr.mxu0 0.0
    %88 = vmatpush1.msra.mxu0 0.0
    %89 = vmatprep.subr.mxu0 0.0
    %90 = vmatpush1.msra.mxu0 0.0
    %91 = vmatprep.subr.mxu0 0.0
    %92 = vmatpush1.msra.mxu0 0.0
    %93 = vmatprep.subr.mxu0 0.0
    %94 = vmatpush1.msra.mxu0 0.0
    %95 = vmatprep.subr.mxu0 0.0
    %96 = vmatpush1.msra.mxu0 0.0
    %97 = vmatprep.subr.mxu0 0.0
    %98 = vmatpush1.msra.mxu0 0.0
    %99 = vmatprep.subr.mxu0 0.0
    %100 = vmatpush1.msra.mxu0 0.0
    %101 = vmatprep.mubr.f32.mxu0 0.0
    %102 = vmatmul.mubr.f32.gmra.mrb[0].mxu0 %v35
    %v103 = vpop.f32.mrb[0].mxu0
    %v104 = vadd.f32 %v31, %v103
    %v105 = vpop.f32.mrb[0].mxu0
    %106 = vdwg.mxu0
    %v107 = vld [vmem:[%s3] sm:$0xff]
    %v108 = vld [vmem:[%s3 + $0x8] sm:$0xff]
    %v109 = vld [vmem:[%s3 + $0x10] sm:$0xff]
    %v110 = vld [vmem:[%s3 + $0x18] sm:$0xff]
    %v111 = vld [vmem:[%s3 + $0x20] sm:$0xff]
    %v112 = vld [vmem:[%s3 + $0x28] sm:$0xff]
    %v113 = vld [vmem:[%s3 + $0x30] sm:$0xff]
    %v114 = vld [vmem:[%s3 + $0x38] sm:$0xff]
    %v115 = vld [vmem:[%s4] sm:$0x1]
    %v117 = vlaneseq
    %v118 = vshrl.u32 %v117, 7
    %v119 = vsub.s32 0, %v118
    %v120 = vrot.slane %v115, %v119
    %vm122 = vcmask 523264
    %v124 = vsel %vm122, %v104, 0
    %126 = vmatprep.subr.mxu0 0.0
    %127 = vmatpush1.msra.mxu0 %v107
    %128 = vmatprep.subr.mxu0 0.0
    %129 = vmatpush1.msra.mxu0 %v108
    %130 = vmatprep.subr.mxu0 0.0
    %131 = vmatpush1.msra.mxu0 %v109
    %132 = vmatprep.subr.mxu0 0.0
    %133 = vmatpush1.msra.mxu0 %v110
    %134 = vmatprep.subr.mxu0 0.0
    %135 = vmatpush1.msra.mxu0 %v111
    %136 = vmatprep.subr.mxu0 0.0
    %137 = vmatpush1.msra.mxu0 %v112
    %138 = vmatprep.subr.mxu0 0.0
    %139 = vmatpush1.msra.mxu0 %v113
    %140 = vmatprep.subr.mxu0 0.0
    %141 = vmatpush1.msra.mxu0 %v114
    %142 = vmatprep.subr.mxu0 0.0
    %143 = vmatpush1.msra.mxu0 0.0
    %144 = vmatprep.subr.mxu0 0.0
    %145 = vmatpush1.msra.mxu0 0.0
    %146 = vmatprep.subr.mxu0 0.0
    %147 = vmatpush1.msra.mxu0 0.0
    %148 = vmatprep.subr.mxu0 0.0
    %149 = vmatpush1.msra.mxu0 0.0
    %150 = vmatprep.subr.mxu0 0.0
    %151 = vmatpush1.msra.mxu0 0.0
    %152 = vmatprep.subr.mxu0 0.0
    %153 = vmatpush1.msra.mxu0 0.0
    %154 = vmatprep.subr.mxu0 0.0
    %155 = vmatpush1.msra.mxu0 0.0
    %156 = vmatprep.subr.mxu0 0.0
    %157 = vmatpush1.msra.mxu0 0.0
    %158 = vmatprep.subr.mxu0 0.0
    %159 = vmatpush1.msra.mxu0 0.0
    %160 = vmatprep.subr.mxu0 0.0
    %161 = vmatpush1.msra.mxu0 0.0
    %162 = vmatprep.subr.mxu0 0.0
    %163 = vmatpush1.msra.mxu0 0.0
    %164 = vmatprep.subr.mxu0 0.0
    %165 = vmatpush1.msra.mxu0 0.0
    %166 = vmatprep.subr.mxu0 0.0
    %167 = vmatpush1.msra.mxu0 0.0
    %168 = vmatprep.subr.mxu0 0.0
    %169 = vmatpush1.msra.mxu0 0.0
    %170 = vmatprep.subr.mxu0 0.0
    %171 = vmatpush1.msra.mxu0 0.0
    %172 = vmatprep.subr.mxu0 0.0
    %173 = vmatpush1.msra.mxu0 0.0
    %174 = vmatprep.subr.mxu0 0.0
    %175 = vmatpush1.msra.mxu0 0.0
    %176 = vmatprep.subr.mxu0 0.0
    %177 = vmatpush1.msra.mxu0 0.0
    %178 = vmatprep.subr.mxu0 0.0
    %179 = vmatpush1.msra.mxu0 0.0
    %180 = vmatprep.subr.mxu0 0.0
    %181 = vmatpush1.msra.mxu0 0.0
    %182 = vmatprep.subr.mxu0 0.0
    %183 = vmatpush1.msra.mxu0 0.0
    %184 = vmatprep.subr.mxu0 0.0
    %185 = vmatpush1.msra.mxu0 0.0
    %186 = vmatprep.subr.mxu0 0.0
    %187 = vmatpush1.msra.mxu0 0.0
    %188 = vmatprep.subr.mxu0 0.0
    %189 = vmatpush1.msra.mxu0 0.0
    %190 = vmatprep.mubr.f32.mxu0 0.0
    %191 = vmatmul.mubr.f32.gmra.mrb[0].mxu0 %v124
    %v192 = vpop.f32.mrb[0].mxu0
    %v193 = vadd.f32 %v120, %v192
    %v194 = vpop.f32.mrb[0].mxu0
    %195 = vdwg.mxu0
    %vm196 = vcmask 130048
    %v197 = vsel %vm196, %v193, -inf
    %198 = vmax.xlane.f32.xlu0 %v197
    %v199 = vpop.xlane.xlu0 %198
    %v200 = vsub.f32 %v193, %v199
    %v201 = vmul.f32 %v200, 1.442695
    %v202 = vpow.pop %v201
    %v203 = vsel %vm196, %v202, 0.0
    %204 = vadd.xlane.f32.xlu0 %v203
    %v205 = vpop.xlane.xlu0 %204
    %v206 = vlog2.pop %v205
    %v207 = vmul.f32 %v206, 0.6931472
    %v208 = vsub.f32 %v200, %v207
    %209 = vst.msk [vmem:[#allocation2] sm:$0xff] %vm196, %v208
    // Predicated region
    $region22: #{my_network_forward.1} parent=1 // pred_check
      _
    $region23: #{my_network_forward.1} parent=1 // pred_check_branch
      %211 = sbr.rel (0) target = $region25
    $region24: #{my_network_forward.1} parent=1 // pred_region
      %s213 = ssub.s32 128, 128
      %214 = vsyncadd [#allocation3], %s213
      %s216 = sshll.u32 [#allocation2], 4
      %s217 = int_to_ptr.vmem [resolvable:$true] %s216
      %219 = dma.vmem_to_hbm [thread:$0]  %s217, 128, %s5, [#allocation3]
    $region25: #{my_network_forward.1} parent=1 // pred_fallthru
      _
    // Predicated region
    $region26: #{my_network_forward.1} parent=1 // pred_check
      _
    $region27: #{my_network_forward.1} parent=1 // pred_check_branch
      %221 = sbr.rel (0) target = $region29
    $region28: #{my_network_forward.1} parent=1 // pred_region
      %222 = dma.done [#allocation3], 128
    $region29: #{my_network_forward.1} parent=1 // pred_fallthru
      _
    %223 = vsyncpa [#allocation3], 1

</llo_original>
